<compile_context>
chip_gen: v5e
topology: v5e:2x2
jax: 0.10.0
libtpu: 0.0.40
codegen_flags: <defaults>
</compile_context>

<pallas_src>
import jax
import jax.numpy as jnp
from jax.experimental import pallas as pl
from jax.experimental.pallas import tpu as pltpu

_LANE = 128      # TPU lane width (fast axis)
_SUBLANE = 8     # f32 sublane height


def _round_up(n, m):
    return ((n + m - 1) // m) * m


def _mlp_kernel(x_ref, w1_ref, b1_ref, w2_ref, b2_ref, o_ref):
    # Layer 1: (TB, D) @ (D, H) on the MXU with f32 accumulation, + bias, ReLU.
    h = jnp.dot(x_ref[...], w1_ref[...], preferred_element_type=jnp.float32)
    h = jnp.maximum(h + b1_ref[...], 0.0)            # bias broadcast + ReLU (VPU)
    # Layer 2: (TB, H) @ (H, Lp). Upcast weights to the f32 activation dtype so
    # activations are never downcast (matches the f32 PyTorch reference even if
    # weights are ever supplied in bf16).
    y = jnp.dot(h, w2_ref[...].astype(h.dtype),
                preferred_element_type=jnp.float32)
    y = y + b2_ref[...]
    o_ref[...] = y.astype(o_ref.dtype)               # lane-dense (Lp = k*128) store


def task_classifier_forward(x, w1, b1, w2, b2, *, tile_b=512,
                            vmem_limit_bytes=32 * 1024 * 1024):
    """Fused 2-layer MLP forward.

    x : (B, input_dim)        w1: (input_dim, hidden)   b1: (hidden,)
    w2: (hidden, n_label)     b2: (n_label,)
    Returns (B, n_label), dtype of x.
    """
    B, D = x.shape
    H = w1.shape[1]
    L = w2.shape[1]

    # --- lane-dense output: pad n_label up to a multiple of 128 lanes ---------
    Lp = _round_up(max(L, _LANE), _LANE)
    w2_p = jnp.zeros((H, Lp), dtype=w2.dtype).at[:, :L].set(w2)
    b2_p = jnp.zeros((1, Lp), dtype=b2.dtype).at[:, :L].set(b2.reshape(1, L))
    b1_2d = b1.reshape(1, H)

    # --- batch tiling: grid over B only; weights stay resident in VMEM --------
    tb = min(int(tile_b), _round_up(B, _SUBLANE))
    tb = _round_up(tb, _SUBLANE)
    B_pad = _round_up(B, tb)
    if B_pad != B:
        x = jnp.pad(x, ((0, B_pad - B), (0, 0)))
    grid = B_pad // tb

    out = pl.pallas_call(
        _mlp_kernel,
        out_shape=jax.ShapeDtypeStruct((B_pad, Lp), x.dtype),
        grid_spec=pl.GridSpec(
            grid=(grid,),
            in_specs=[
                pl.BlockSpec((tb, D), lambda i: (i, 0)),   # x: tiled over batch
                pl.BlockSpec((D, H), lambda i: (0, 0)),    # w1: resident
                pl.BlockSpec((1, H), lambda i: (0, 0)),    # b1: resident
                pl.BlockSpec((H, Lp), lambda i: (0, 0)),   # w2 (padded): resident
                pl.BlockSpec((1, Lp), lambda i: (0, 0)),   # b2 (padded): resident
            ],
            out_specs=pl.BlockSpec((tb, Lp), lambda i: (i, 0)),
        ),
        compiler_params=pltpu.CompilerParams(
            dimension_semantics=("parallel",),             # batch is independent
            vmem_limit_bytes=vmem_limit_bytes,
        ),
    )(x, w1, b1_2d, w2_p, b2_p)

    return out[:B, :L]


def _reference_forward(x, w1, b1, w2, b2):
    h = jnp.maximum(x @ w1 + b1, 0.0)
    return h @ w2 + b2


if __name__ == "__main__":
    # Shapes consistent with the module: input_dim=32, hidden_dim=32, n_label=8.
    input_dim, hidden_dim, n_label = 32, 32, 8

    key = jax.random.PRNGKey(0)
    kx, kw1, kb1, kw2, kb2 = jax.random.split(key, 5)

    # PyTorch Linear default init: U(-1/sqrt(fan_in), 1/sqrt(fan_in)).
    lim1 = 1.0 / jnp.sqrt(jnp.float32(input_dim))
    lim2 = 1.0 / jnp.sqrt(jnp.float32(hidden_dim))
    w1 = jax.random.uniform(kw1, (input_dim, hidden_dim), jnp.float32, -lim1, lim1)
    b1 = jax.random.uniform(kb1, (hidden_dim,), jnp.float32, -lim1, lim1)
    w2 = jax.random.uniform(kw2, (hidden_dim, n_label), jnp.float32, -lim2, lim2)
    b2 = jax.random.uniform(kb2, (n_label,), jnp.float32, -lim2, lim2)

    # 1) Small batch (single grid step, TILE_B = 8).
    B_small = 8
    x_small = jax.random.normal(kx, (B_small, input_dim), dtype=jnp.float32)
    out_small = jax.block_until_ready(
        task_classifier_forward(x_small, w1, b1, w2, b2))
    ref_small = _reference_forward(x_small, w1, b1, w2, b2)
    assert out_small.shape == (B_small, n_label)
    assert jnp.allclose(out_small, ref_small, atol=1e-5, rtol=1e-5), \
        "mismatch vs reference (small batch)"

    # 2) Modest batch that exercises multi-step grid + batch padding
    #    (B=300, tile_b=128 -> padded to 384 rows, grid=(3,), 'parallel').
    B_big = 300
    x_big = jax.random.normal(kx, (B_big, input_dim), dtype=jnp.float32)
    out_big = jax.block_until_ready(
        task_classifier_forward(x_big, w1, b1, w2, b2, tile_b=128))
    ref_big = _reference_forward(x_big, w1, b1, w2, b2)
    assert out_big.shape == (B_big, n_label)
    assert jnp.allclose(out_big, ref_big, atol=1e-5, rtol=1e-5), \
        "mismatch vs reference (tiled batch)"

    print("KERNEL_OK")
</pallas_src>

<mosaic_0001>
module attributes {stable_mosaic.version = 11 : i64} {
  func.func @_mlp_kernel(%arg0: i32, %arg1: memref<8x32xf32, #tpu.memory_space<vmem>>, %arg2: memref<32x32xf32, #tpu.memory_space<vmem>>, %arg3: memref<1x32xf32, #tpu.memory_space<vmem>>, %arg4: memref<32x128xf32, #tpu.memory_space<vmem>>, %arg5: memref<1x128xf32, #tpu.memory_space<vmem>>, %arg6: memref<8x128xf32, #tpu.memory_space<vmem>>) attributes {dimension_semantics = [#tpu.dimension_semantics<parallel>], iteration_bounds = array<i64: 1>, scalar_prefetch = 0 : i64, scratch_operands = 0 : i64, tpu.core_type = #tpu.core_type<tc>, window_params = [{transform_indices = @transform_0, window_bounds = array<i64: 8, 32>}, {pipeline_mode = #tpu.pipeline_mode<synchronous>, transform_indices = @transform_1, window_bounds = array<i64: 32, 32>}, {pipeline_mode = #tpu.pipeline_mode<synchronous>, transform_indices = @transform_2, window_bounds = array<i64: 1, 32>}, {pipeline_mode = #tpu.pipeline_mode<synchronous>, transform_indices = @transform_3, window_bounds = array<i64: 32, 128>}, {pipeline_mode = #tpu.pipeline_mode<synchronous>, transform_indices = @transform_4, window_bounds = array<i64: 1, 128>}, {transform_indices = @transform_5, window_bounds = array<i64: 8, 128>}]} {
    %c0 = arith.constant 0 : index
    %c0_0 = arith.constant 0 : index
    %0 = vector.load %arg1[%c0, %c0_0] : memref<8x32xf32, #tpu.memory_space<vmem>>, vector<8x32xf32>
    %c0_1 = arith.constant 0 : index
    %c0_2 = arith.constant 0 : index
    %1 = vector.load %arg2[%c0_1, %c0_2] : memref<32x32xf32, #tpu.memory_space<vmem>>, vector<32x32xf32>
    %cst = arith.constant dense<0.000000e+00> : vector<8x32xf32>
    %2 = tpu.matmul %0, %1, %cst {dimension_numbers = #tpu.dot_dimension_numbers<[1], [0], [0], [1], [0, 0, 1, 1], [], []>} : vector<8x32xf32>, vector<32x32xf32>, vector<8x32xf32> -> vector<8x32xf32>
    %c0_3 = arith.constant 0 : index
    %c0_4 = arith.constant 0 : index
    %3 = vector.load %arg3[%c0_3, %c0_4] : memref<1x32xf32, #tpu.memory_space<vmem>>, vector<1x32xf32>
    %4 = vector.broadcast %3 : vector<1x32xf32> to vector<8x32xf32>
    %5 = arith.addf %2, %4 : vector<8x32xf32>
    %cst_5 = arith.constant 0.000000e+00 : f32
    %6 = vector.broadcast %cst_5 : f32 to vector<8x32xf32>
    %7 = arith.maximumf %5, %6 : vector<8x32xf32>
    %c0_6 = arith.constant 0 : index
    %c0_7 = arith.constant 0 : index
    %8 = vector.load %arg4[%c0_6, %c0_7] : memref<32x128xf32, #tpu.memory_space<vmem>>, vector<32x128xf32>
    %cst_8 = arith.constant dense<0.000000e+00> : vector<8x128xf32>
    %9 = tpu.matmul %7, %8, %cst_8 {dimension_numbers = #tpu.dot_dimension_numbers<[1], [0], [0], [1], [0, 0, 1, 1], [], []>} : vector<8x32xf32>, vector<32x128xf32>, vector<8x128xf32> -> vector<8x128xf32>
    %c0_9 = arith.constant 0 : index
    %c0_10 = arith.constant 0 : index
    %10 = vector.load %arg5[%c0_9, %c0_10] : memref<1x128xf32, #tpu.memory_space<vmem>>, vector<1x128xf32>
    %11 = vector.broadcast %10 : vector<1x128xf32> to vector<8x128xf32>
    %12 = arith.addf %9, %11 : vector<8x128xf32>
    %c0_11 = arith.constant 0 : index
    %c0_12 = arith.constant 0 : index
    %13 = vector.load %arg6[%c0_11, %c0_12] : memref<8x128xf32, #tpu.memory_space<vmem>>, vector<8x128xf32>
    tpu.vector_store %arg6[%c0_11, %c0_12], %12 {strides = array<i32>} : memref<8x128xf32, #tpu.memory_space<vmem>>, vector<8x128xf32>,
    return
  }
  func.func @transform_0(%arg0: i32) -> (i32, i32) {
    %c0_i32 = arith.constant 0 : i32
    %c0_i32_0 = arith.constant 0 : i32
    return %arg0, %c0_i32 : i32, i32
  }
  func.func @transform_1(%arg0: i32) -> (i32, i32) {
    %c0_i32 = arith.constant 0 : i32
    %c0_i32_0 = arith.constant 0 : i32
    %c0_i32_1 = arith.constant 0 : i32
    return %c0_i32, %c0_i32_0 : i32, i32
  }
  func.func @transform_2(%arg0: i32) -> (i32, i32) {
    %c0_i32 = arith.constant 0 : i32
    %c0_i32_0 = arith.constant 0 : i32
    %c0_i32_1 = arith.constant 0 : i32
    return %c0_i32, %c0_i32_0 : i32, i32
  }
  func.func @transform_3(%arg0: i32) -> (i32, i32) {
    %c0_i32 = arith.constant 0 : i32
    %c0_i32_0 = arith.constant 0 : i32
    %c0_i32_1 = arith.constant 0 : i32
    return %c0_i32, %c0_i32_0 : i32, i32
  }
  func.func @transform_4(%arg0: i32) -> (i32, i32) {
    %c0_i32 = arith.constant 0 : i32
    %c0_i32_0 = arith.constant 0 : i32
    %c0_i32_1 = arith.constant 0 : i32
    return %c0_i32, %c0_i32_0 : i32, i32
  }
  func.func @transform_5(%arg0: i32) -> (i32, i32) {
    %c0_i32 = arith.constant 0 : i32
    %c0_i32_0 = arith.constant 0 : i32
    return %arg0, %c0_i32 : i32, i32
  }
}

</mosaic_0001>

<llo_original>
// kernel: tpu_custom_call.1
$region0: #{tpu_custom_call.1}
  #allocation0 [shape = 'u32[]', space=smem, size = 0x4, offset = 0x4, fixed_abs, tag = 'smem constant byte address 0x4 - core index']
  #allocation1 [shape = 'u32[72,128]{1,0:T(1,128)}', space=vmem, size = 0x9000, scoped, tag = 'internal scratch']
  %s0 = inlined_call_operand.hbm [shape: f32[8,32], index: 0, kind: input, shape index: {}]
  %s1 = inlined_call_operand.hbm [shape: f32[32,32], index: 1, kind: input, shape index: {}]
  %s2 = inlined_call_operand.vmem [shape: f32[1,32], index: 2, kind: input, shape index: {}]
  %s3 = inlined_call_operand.hbm [shape: f32[32,128], index: 3, kind: input, shape index: {}]
  %s4 = inlined_call_operand.vmem [shape: f32[1,128], index: 4, kind: input, shape index: {}]
  %s5 = inlined_call_operand.hbm [shape: f32[8,128], index: 5, kind: output, shape index: {}]
  %s6 = sld [smem:[#allocation0]]
  $region42: #{tpu_custom_call.1} parent=0
    _
  %s8 = ssub.s32 1, %s6
  %s9 = scalar_select 0, %s8, %s6
  $region1: #{tpu_custom_call.1} parent=0
    #allocation2 [shape = 'u8[4096]{0}', space=vmem, size = 0x1000, scoped, tag = 'input window, operand 0, single buffered']
    #allocation3 [shape = 's32[1]{0}', space=sflag, size = 0x4, scoped, tag = 'scoped memory for tpu_custom_call.1']
    #allocation4 [shape = 's32[1]{0}', space=sflag, size = 0x4, scoped, tag = 'scoped memory for tpu_custom_call.1']
    #allocation5 [shape = 'u8[16384]{0}', space=vmem, size = 0x4000, scoped, tag = 'input window, operand 1, single buffered']
    #allocation6 [shape = 's32[1]{0}', space=sflag, size = 0x4, scoped, tag = 'scoped memory for tpu_custom_call.1']
    #allocation7 [shape = 'u8[16384]{0}', space=vmem, size = 0x4000, scoped, tag = 'input window, operand 3, single buffered']
    #allocation8 [shape = 'u8[4096]{0}', space=vmem, size = 0x1000, scoped, tag = 'output window, operand 0, single buffered']
    %10 = vsyncpa [#allocation3], 0
    %11 = vsyncpa [#allocation6], 0
    %12 = vsyncpa [#allocation4], 0
    // Predicated region
    $region2: #{tpu_custom_call.1} parent=1 // pred_check
      _
    $region3: #{tpu_custom_call.1} parent=1 // pred_check_branch
      %14 = sbr.rel (0) target = $region5
    $region4: #{tpu_custom_call.1} parent=1 // pred_region
      %16 = vsyncadd [#allocation3], 0
      %s18 = sshll.u32 %s0, 4
      %s19 = int_to_ptr.hbm [resolvable:$true] %s18
      %s20 = sshll.u32 [#allocation2], 4
      %s21 = int_to_ptr.vmem [resolvable:$true] %s20
      %23 = dma.hbm_to_vmem [thread:$0]  %s19, 128, %s21, [#allocation3]
    $region5: #{tpu_custom_call.1} parent=1 // pred_fallthru
      _
    // Predicated region
    $region6: #{tpu_custom_call.1} parent=1 // pred_check
      _
    $region7: #{tpu_custom_call.1} parent=1 // pred_check_branch
      %25 = sbr.rel (0) target = $region9
    $region8: #{tpu_custom_call.1} parent=1 // pred_region
      %27 = vsyncadd [#allocation6], 0
      %s28 = sshll.u32 %s1, 4
      %s29 = int_to_ptr.hbm [resolvable:$true] %s28
      %s30 = sshll.u32 [#allocation5], 4
      %s31 = int_to_ptr.vmem [resolvable:$true] %s30
      %36 = dma.hbm_to_vmem [thread:$0]  %s29, 512, %s31, [#allocation6], 128, 128, 8
    $region9: #{tpu_custom_call.1} parent=1 // pred_fallthru
      _
    // Predicated region
    $region10: #{tpu_custom_call.1} parent=1 // pred_check
      _
    $region11: #{tpu_custom_call.1} parent=1 // pred_check_branch
      %38 = sbr.rel (0) target = $region13
    $region12: #{tpu_custom_call.1} parent=1 // pred_region
      _
    $region13: #{tpu_custom_call.1} parent=1 // pred_fallthru
      _
    // Predicated region
    $region14: #{tpu_custom_call.1} parent=1 // pred_check
      _
    $region15: #{tpu_custom_call.1} parent=1 // pred_check_branch
      %40 = sbr.rel (0) target = $region17
    $region16: #{tpu_custom_call.1} parent=1 // pred_region
      %42 = vsyncadd [#allocation6], 0
      %s43 = sshll.u32 %s3, 4
      %s44 = int_to_ptr.hbm [resolvable:$true] %s43
      %s45 = sshll.u32 [#allocation7], 4
      %s46 = int_to_ptr.vmem [resolvable:$true] %s45
      %51 = dma.hbm_to_vmem [thread:$0]  %s44, 512, %s46, [#allocation6], 128, 128, 8
    $region17: #{tpu_custom_call.1} parent=1 // pred_fallthru
      _
    // Predicated region
    $region18: #{tpu_custom_call.1} parent=1 // pred_check
      _
    $region19: #{tpu_custom_call.1} parent=1 // pred_check_branch
      %53 = sbr.rel (0) target = $region21
    $region20: #{tpu_custom_call.1} parent=1 // pred_region
      _
    $region21: #{tpu_custom_call.1} parent=1 // pred_fallthru
      _
    // Predicated region
    $region22: #{tpu_custom_call.1} parent=1 // pred_check
      _
    $region23: #{tpu_custom_call.1} parent=1 // pred_check_branch
      %55 = sbr.rel (0) target = $region25
    $region24: #{tpu_custom_call.1} parent=1 // pred_region
      %57 = dma.done [#allocation3], 128
    $region25: #{tpu_custom_call.1} parent=1 // pred_fallthru
      _
    // Predicated region
    $region26: #{tpu_custom_call.1} parent=1 // pred_check
      _
    $region27: #{tpu_custom_call.1} parent=1 // pred_check_branch
      %59 = sbr.rel (0) target = $region29
    $region28: #{tpu_custom_call.1} parent=1 // pred_region
      %61 = dma.done [#allocation6], 512
    $region29: #{tpu_custom_call.1} parent=1 // pred_fallthru
      _
    // Predicated region
    $region30: #{tpu_custom_call.1} parent=1 // pred_check
      _
    $region31: #{tpu_custom_call.1} parent=1 // pred_check_branch
      %63 = sbr.rel (0) target = $region33
    $region32: #{tpu_custom_call.1} parent=1 // pred_region
      %65 = dma.done [#allocation6], 512
    $region33: #{tpu_custom_call.1} parent=1 // pred_fallthru
      _
    %v66 = vld [vmem:[#allocation2] sm:$0xff]
    %v67 = vld [vmem:[#allocation5] sm:$0xff]
    %v68 = vld [vmem:[#allocation5 + $0x8] sm:$0xff]
    %v69 = vld [vmem:[#allocation5 + $0x10] sm:$0xff]
    %v70 = vld [vmem:[#allocation5 + $0x18] sm:$0xff]
    %v71 = vld [vmem:[%s2] sm:$0x1]
    %v73 = vperm.slane %v71, 0
    %vm75 = vcmask 261120
    %v77 = vsel %vm75, %v66, 0
    %79 = vmatpush.msra.mxu0 0.0
    %80 = vmatpush.msra.mxu0 0.0
    %81 = vmatpush.msra.mxu0 0.0
    %82 = vmatpush.msra.mxu0 0.0
    %83 = vmatpush.msra.mxu0 0.0
    %84 = vmatpush.msra.mxu0 0.0
    %85 = vmatpush.msra.mxu0 0.0
    %86 = vmatpush.msra.mxu0 0.0
    %87 = vmatpush.msra.mxu0 0.0
    %88 = vmatpush.msra.mxu0 0.0
    %89 = vmatpush.msra.mxu0 0.0
    %90 = vmatpush.msra.mxu0 0.0
    %91 = vmatpush.msra.mxu0 %v70
    %92 = vmatpush.msra.mxu0 %v69
    %93 = vmatpush.msra.mxu0 %v68
    %94 = vmatpush.msra.mxu0 %v67
    %95 = vmatmul.f32.gmra.mxu0 %v77
    %v96 = vpop.f32.mrf.mxu0
    %v97 = vadd.f32 %v73, %v96
    %98 = vdwg.mxu0
    %v99 = vmax.f32 %v97, 0.0
    %v100 = vld [vmem:[#allocation7] sm:$0xff]
    %v101 = vld [vmem:[#allocation7 + $0x8] sm:$0xff]
    %v102 = vld [vmem:[#allocation7 + $0x10] sm:$0xff]
    %v103 = vld [vmem:[#allocation7 + $0x18] sm:$0xff]
    %v104 = vld [vmem:[%s4] sm:$0x1]
    %v106 = vperm.slane %v104, 0
    %v109 = vsel %vm75, %v99, 0
    %111 = vmatpush.msra.mxu0 0.0
    %112 = vmatpush.msra.mxu0 0.0
    %113 = vmatpush.msra.mxu0 0.0
    %114 = vmatpush.msra.mxu0 0.0
    %115 = vmatpush.msra.mxu0 0.0
    %116 = vmatpush.msra.mxu0 0.0
    %117 = vmatpush.msra.mxu0 0.0
    %118 = vmatpush.msra.mxu0 0.0
    %119 = vmatpush.msra.mxu0 0.0
    %120 = vmatpush.msra.mxu0 0.0
    %121 = vmatpush.msra.mxu0 0.0
    %122 = vmatpush.msra.mxu0 0.0
    %123 = vmatpush.msra.mxu0 %v103
    %124 = vmatpush.msra.mxu0 %v102
    %125 = vmatpush.msra.mxu0 %v101
    %126 = vmatpush.msra.mxu0 %v100
    %127 = vmatmul.f32.gmra.mxu0 %v109
    %v128 = vpop.f32.mrf.mxu0
    %v129 = vadd.f32 %v106, %v128
    %130 = vdwg.mxu0
    %131 = vst [vmem:[#allocation8] sm:$0xff] %v129
    // Predicated region
    $region34: #{tpu_custom_call.1} parent=1 // pred_check
      _
    $region35: #{tpu_custom_call.1} parent=1 // pred_check_branch
      %133 = sbr.rel (0) target = $region37
    $region36: #{tpu_custom_call.1} parent=1 // pred_region
      %135 = vsyncadd [#allocation4], 0
      %s137 = sshll.u32 [#allocation8], 4
      %s138 = int_to_ptr.vmem [resolvable:$true] %s137
      %s139 = sshll.u32 %s5, 4
      %s140 = int_to_ptr.hbm [resolvable:$true] %s139
      %142 = dma.vmem_to_hbm [thread:$0]  %s138, 128, %s140, [#allocation4]
    $region37: #{tpu_custom_call.1} parent=1 // pred_fallthru
      _
    // Predicated region
    $region38: #{tpu_custom_call.1} parent=1 // pred_check
      _
    $region39: #{tpu_custom_call.1} parent=1 // pred_check_branch
      %144 = sbr.rel (0) target = $region41
    $region40: #{tpu_custom_call.1} parent=1 // pred_region
      %146 = dma.done [#allocation4], 128
    $region41: #{tpu_custom_call.1} parent=1 // pred_fallthru
      _
    %147 = vsyncpa [#allocation3], 1
    %148 = vsyncpa [#allocation6], 1
    %149 = vsyncpa [#allocation4], 1

</llo_original>
